<compile_context>
chip_gen: v5e
topology: v5e:2x2
jax: 0.10.0
libtpu: 0.0.40
codegen_flags: <defaults>
</compile_context>

<pallas_src>
import jax
import jax.numpy as jnp
from jax.experimental import pallas as pl
from jax.experimental.pallas import tpu as pltpu


def _round_up(n, m):
    return ((n + m - 1) // m) * m


def _pick_tm(batch):
    """Rows per batch tile."""
    if batch < 8:
        return batch                        # block == full batch dim (tiny B)
    if batch <= 512:
        return _round_up(batch, 8)          # single grid step
    # Large B: 512-2048 row tiles; keep >= 2 grid steps so both v7x
    # TensorCores get work on the "parallel" grid axis.
    return max(512, min(2048, _round_up(batch // 2, 256)))


def linear_sub_relu_kernel(x_ref, wt_ref, fb_ref, o_ref):
    # x_ref:  (TM, 256) f32 VMEM  -- streamed batch tile
    # wt_ref: (256, 10) f32 VMEM  -- W^T, resident across grid steps
    # fb_ref: (1, 10)   f32 VMEM  -- bias - other, resident
    # o_ref:  (TM, 10)  f32 VMEM
    y = jnp.dot(x_ref[...], wt_ref[...], preferred_element_type=jnp.float32)
    o_ref[...] = jnp.maximum(y + fb_ref[...], 0.0).astype(o_ref.dtype)


def make_model_forward(w, b, other):
    """Precompute weight-side operands once (parameter-load time)."""
    out_feat, in_feat = w.shape                                    # (10, 256)
    wt = jnp.asarray(w.T, jnp.float32)                             # (256, 10)
    fb = (b.reshape(1, -1) - other.reshape(1, -1)).astype(jnp.float32)  # (1, 10)

    def forward(x):
        batch = x.shape[0]
        x2d = x.reshape(batch, -1).astype(jnp.float32)   # v1 = x1.view(B, -1)
        tm = _pick_tm(batch)
        return pl.pallas_call(
            linear_sub_relu_kernel,
            out_shape=jax.ShapeDtypeStruct((batch, out_feat), jnp.float32),
            grid=(pl.cdiv(batch, tm),),
            in_specs=[
                pl.BlockSpec((tm, in_feat), lambda i: (i, 0)),        # x tile
                pl.BlockSpec((in_feat, out_feat), lambda i: (0, 0)),  # W^T resident
                pl.BlockSpec((1, out_feat), lambda i: (0, 0)),        # fused bias
            ],
            out_specs=pl.BlockSpec((tm, out_feat), lambda i: (i, 0)),
            compiler_params=pltpu.CompilerParams(
                dimension_semantics=("parallel",)),
        )(x2d, wt, fb)

    return jax.jit(forward)


if __name__ == "__main__":
    key = jax.random.PRNGKey(0)
    kx, kw, kb, ko, kx2 = jax.random.split(key, 5)

    IN, OUT = 256, 10

    # Deterministic Linear(256, 10) params (PyTorch-style uniform init bound).
    bound = 1.0 / jnp.sqrt(jnp.float32(IN))
    w = jax.random.uniform(kw, (OUT, IN), jnp.float32, -bound, bound)
    b = jax.random.uniform(kb, (OUT,), jnp.float32, -bound, bound)
    # Free global `other` from the original module, made deterministic here.
    other = jax.random.normal(ko, (1, OUT), dtype=jnp.float32)

    forward = make_model_forward(w, b, other)

    def ref_fn(x):
        y = jnp.dot(x.reshape(x.shape[0], -1), w.T,
                    precision=jax.lax.Precision.HIGHEST)
        return jnp.maximum(y + b[None, :] - other, 0.0)

    # Spec-shaped input: torch.randn(1, 256).
    x1 = jax.random.normal(kx, (1, IN), dtype=jnp.float32)
    out1 = jax.block_until_ready(forward(x1))
    assert out1.shape == (1, OUT)
    assert jnp.allclose(out1, ref_fn(x1), atol=1e-5, rtol=1e-5)

    # Larger, non-multiple batch: exercises tiled grid + ragged final block.
    x2 = jax.random.normal(kx2, (600, IN), dtype=jnp.float32)
    out2 = jax.block_until_ready(forward(x2))
    assert out2.shape == (600, OUT)
    assert jnp.allclose(out2, ref_fn(x2), atol=1e-5, rtol=1e-5)

    print("KERNEL_OK")
</pallas_src>

<mosaic_0001>
module attributes {stable_mosaic.version = 11 : i64} {
  func.func @linear_sub_relu_kernel(%arg0: i32, %arg1: memref<1x256xf32, #tpu.memory_space<vmem>>, %arg2: memref<256x10xf32, #tpu.memory_space<vmem>>, %arg3: memref<1x10xf32, #tpu.memory_space<vmem>>, %arg4: memref<1x10xf32, #tpu.memory_space<vmem>>) attributes {dimension_semantics = [#tpu.dimension_semantics<parallel>], iteration_bounds = array<i64: 1>, scalar_prefetch = 0 : i64, scratch_operands = 0 : i64, tpu.core_type = #tpu.core_type<tc>, window_params = [{transform_indices = @transform_0, window_bounds = array<i64: 1, 256>}, {pipeline_mode = #tpu.pipeline_mode<synchronous>, transform_indices = @transform_1, window_bounds = array<i64: 256, 10>}, {pipeline_mode = #tpu.pipeline_mode<synchronous>, transform_indices = @transform_2, window_bounds = array<i64: 1, 10>}, {transform_indices = @transform_3, window_bounds = array<i64: 1, 10>}]} {
    %c0 = arith.constant 0 : index
    %c0_0 = arith.constant 0 : index
    %0 = vector.load %arg1[%c0, %c0_0] : memref<1x256xf32, #tpu.memory_space<vmem>>, vector<1x256xf32>
    %c0_1 = arith.constant 0 : index
    %c0_2 = arith.constant 0 : index
    %1 = vector.load %arg2[%c0_1, %c0_2] : memref<256x10xf32, #tpu.memory_space<vmem>>, vector<256x10xf32>
    %cst = arith.constant dense<0.000000e+00> : vector<1x10xf32>
    %2 = tpu.matmul %0, %1, %cst {dimension_numbers = #tpu.dot_dimension_numbers<[1], [0], [0], [1], [0, 0, 1, 1], [], []>} : vector<1x256xf32>, vector<256x10xf32>, vector<1x10xf32> -> vector<1x10xf32>
    %c0_3 = arith.constant 0 : index
    %c0_4 = arith.constant 0 : index
    %3 = vector.load %arg3[%c0_3, %c0_4] : memref<1x10xf32, #tpu.memory_space<vmem>>, vector<1x10xf32>
    %4 = arith.addf %2, %3 : vector<1x10xf32>
    %cst_5 = arith.constant 0.000000e+00 : f32
    %5 = vector.broadcast %cst_5 : f32 to vector<1x10xf32>
    %6 = arith.maximumf %4, %5 : vector<1x10xf32>
    %c0_6 = arith.constant 0 : index
    %c0_7 = arith.constant 0 : index
    %7 = vector.load %arg4[%c0_6, %c0_7] : memref<1x10xf32, #tpu.memory_space<vmem>>, vector<1x10xf32>
    tpu.vector_store %arg4[%c0_6, %c0_7], %6 {strides = array<i32>} : memref<1x10xf32, #tpu.memory_space<vmem>>, vector<1x10xf32>,
    return
  }
  func.func @transform_0(%arg0: i32) -> (i32, i32) {
    %c0_i32 = arith.constant 0 : i32
    %c0_i32_0 = arith.constant 0 : i32
    return %arg0, %c0_i32 : i32, i32
  }
  func.func @transform_1(%arg0: i32) -> (i32, i32) {
    %c0_i32 = arith.constant 0 : i32
    %c0_i32_0 = arith.constant 0 : i32
    %c0_i32_1 = arith.constant 0 : i32
    return %c0_i32, %c0_i32_0 : i32, i32
  }
  func.func @transform_2(%arg0: i32) -> (i32, i32) {
    %c0_i32 = arith.constant 0 : i32
    %c0_i32_0 = arith.constant 0 : i32
    %c0_i32_1 = arith.constant 0 : i32
    return %c0_i32, %c0_i32_0 : i32, i32
  }
  func.func @transform_3(%arg0: i32) -> (i32, i32) {
    %c0_i32 = arith.constant 0 : i32
    %c0_i32_0 = arith.constant 0 : i32
    return %arg0, %c0_i32 : i32, i32
  }
}

</mosaic_0001>

<llo_original>
// kernel: forward.1
$region0: #{forward.1}
  #allocation0 [shape = 'u32[]', space=smem, size = 0x4, offset = 0x4, fixed_abs, tag = 'smem constant byte address 0x4 - core index']
  #allocation1 [shape = 'u32[72,128]{1,0:T(1,128)}', space=vmem, size = 0x9000, scoped, tag = 'internal scratch']
  %s0 = inlined_call_operand.hbm [shape: f32[1,256], index: 0, kind: input, shape index: {}]
  %s1 = inlined_call_operand.hbm [shape: f32[256,10], index: 1, kind: input, shape index: {}]
  %s2 = inlined_call_operand.vmem [shape: f32[1,10], index: 2, kind: input, shape index: {}]
  %s3 = inlined_call_operand.hbm [shape: f32[1,10], index: 3, kind: output, shape index: {}]
  %s4 = sld [smem:[#allocation0]]
  $region30: #{forward.1} parent=0
    _
  %s6 = ssub.s32 1, %s4
  %s7 = scalar_select 0, %s6, %s4
  $region1: #{forward.1} parent=0
    #allocation2 [shape = 'u8[1024]{0}', space=vmem, size = 0x400, scoped, tag = 'input window, operand 0, single buffered']
    #allocation3 [shape = 's32[1]{0}', space=sflag, size = 0x4, scoped, tag = 'scoped memory for forward.1']
    #allocation4 [shape = 's32[1]{0}', space=sflag, size = 0x4, scoped, tag = 'scoped memory for forward.1']
    #allocation5 [shape = 'u8[131072]{0}', space=vmem, size = 0x20000, scoped, tag = 'input window, operand 1, single buffered']
    #allocation6 [shape = 's32[1]{0}', space=sflag, size = 0x4, scoped, tag = 'scoped memory for forward.1']
    #allocation7 [shape = 'u8[512]{0}', space=vmem, size = 0x400, scoped, tag = 'output window, operand 0, single buffered']
    %8 = vsyncpa [#allocation3], 0
    %9 = vsyncpa [#allocation6], 0
    %10 = vsyncpa [#allocation4], 0
    // Predicated region
    $region2: #{forward.1} parent=1 // pred_check
      _
    $region3: #{forward.1} parent=1 // pred_check_branch
      %12 = sbr.rel (0) target = $region5
    $region4: #{forward.1} parent=1 // pred_region
      %14 = vsyncadd [#allocation3], 0
      %s16 = sshll.u32 %s0, 4
      %s17 = int_to_ptr.hbm [resolvable:$true] %s16
      %s18 = sshll.u32 [#allocation2], 4
      %s19 = int_to_ptr.vmem [resolvable:$true] %s18
      %21 = dma.hbm_to_vmem [thread:$0]  %s17, 32, %s19, [#allocation3]
    $region5: #{forward.1} parent=1 // pred_fallthru
      _
    // Predicated region
    $region6: #{forward.1} parent=1 // pred_check
      _
    $region7: #{forward.1} parent=1 // pred_check_branch
      %23 = sbr.rel (0) target = $region9
    $region8: #{forward.1} parent=1 // pred_region
      %25 = vsyncadd [#allocation6], 0
      %s26 = sshll.u32 %s1, 4
      %s27 = int_to_ptr.hbm [resolvable:$true] %s26
      %s28 = sshll.u32 [#allocation5], 4
      %s29 = int_to_ptr.vmem [resolvable:$true] %s28
      %34 = dma.hbm_to_vmem [thread:$0]  %s27, 4096, %s29, [#allocation6], 128, 128, 8
    $region9: #{forward.1} parent=1 // pred_fallthru
      _
    // Predicated region
    $region10: #{forward.1} parent=1 // pred_check
      _
    $region11: #{forward.1} parent=1 // pred_check_branch
      %36 = sbr.rel (0) target = $region13
    $region12: #{forward.1} parent=1 // pred_region
      _
    $region13: #{forward.1} parent=1 // pred_fallthru
      _
    // Predicated region
    $region14: #{forward.1} parent=1 // pred_check
      _
    $region15: #{forward.1} parent=1 // pred_check_branch
      %38 = sbr.rel (0) target = $region17
    $region16: #{forward.1} parent=1 // pred_region
      %40 = dma.done [#allocation3], 32
    $region17: #{forward.1} parent=1 // pred_fallthru
      _
    // Predicated region
    $region18: #{forward.1} parent=1 // pred_check
      _
    $region19: #{forward.1} parent=1 // pred_check_branch
      %42 = sbr.rel (0) target = $region21
    $region20: #{forward.1} parent=1 // pred_region
      %44 = dma.done [#allocation6], 4096
    $region21: #{forward.1} parent=1 // pred_fallthru
      _
    %v45 = vld [vmem:[#allocation2] sm:$0x3]
    %v46 = vld [vmem:[#allocation5] sm:$0xff]
    %v47 = vld [vmem:[#allocation5 + $0x8] sm:$0xff]
    %v48 = vld [vmem:[#allocation5 + $0x10] sm:$0xff]
    %v49 = vld [vmem:[#allocation5 + $0x18] sm:$0xff]
    %v50 = vld [vmem:[#allocation5 + $0x20] sm:$0xff]
    %v51 = vld [vmem:[#allocation5 + $0x28] sm:$0xff]
    %v52 = vld [vmem:[#allocation5 + $0x30] sm:$0xff]
    %v53 = vld [vmem:[#allocation5 + $0x38] sm:$0xff]
    %v54 = vld [vmem:[#allocation5 + $0x40] sm:$0xff]
    %v55 = vld [vmem:[#allocation5 + $0x48] sm:$0xff]
    %v56 = vld [vmem:[#allocation5 + $0x50] sm:$0xff]
    %v57 = vld [vmem:[#allocation5 + $0x58] sm:$0xff]
    %v58 = vld [vmem:[#allocation5 + $0x60] sm:$0xff]
    %v59 = vld [vmem:[#allocation5 + $0x68] sm:$0xff]
    %v60 = vld [vmem:[#allocation5 + $0x70] sm:$0xff]
    %v61 = vld [vmem:[#allocation5 + $0x78] sm:$0xff]
    %v62 = vld [vmem:[#allocation5 + $0x80] sm:$0xff]
    %v63 = vld [vmem:[#allocation5 + $0x88] sm:$0xff]
    %v64 = vld [vmem:[#allocation5 + $0x90] sm:$0xff]
    %v65 = vld [vmem:[#allocation5 + $0x98] sm:$0xff]
    %v66 = vld [vmem:[#allocation5 + $0xa0] sm:$0xff]
    %v67 = vld [vmem:[#allocation5 + $0xa8] sm:$0xff]
    %v68 = vld [vmem:[#allocation5 + $0xb0] sm:$0xff]
    %v69 = vld [vmem:[#allocation5 + $0xb8] sm:$0xff]
    %v70 = vld [vmem:[#allocation5 + $0xc0] sm:$0xff]
    %v71 = vld [vmem:[#allocation5 + $0xc8] sm:$0xff]
    %v72 = vld [vmem:[#allocation5 + $0xd0] sm:$0xff]
    %v73 = vld [vmem:[#allocation5 + $0xd8] sm:$0xff]
    %v74 = vld [vmem:[#allocation5 + $0xe0] sm:$0xff]
    %v75 = vld [vmem:[#allocation5 + $0xe8] sm:$0xff]
    %v76 = vld [vmem:[#allocation5 + $0xf0] sm:$0xff]
    %v77 = vld [vmem:[#allocation5 + $0xf8] sm:$0xff]
    %v78 = vld [vmem:[%s2] sm:$0x1]
    %v80 = vperm.slane %v45, 0
    %v81 = vperm.slane %v45, 1
    %84 = vmatpush.msra.mxu0 %v61
    %85 = vmatpush.msra.mxu0 %v60
    %86 = vmatpush.msra.mxu0 %v59
    %87 = vmatpush.msra.mxu0 %v58
    %88 = vmatpush.msra.mxu0 %v57
    %89 = vmatpush.msra.mxu0 %v56
    %90 = vmatpush.msra.mxu0 %v55
    %91 = vmatpush.msra.mxu0 %v54
    %92 = vmatpush.msra.mxu0 %v53
    %93 = vmatpush.msra.mxu0 %v52
    %94 = vmatpush.msra.mxu0 %v51
    %95 = vmatpush.msra.mxu0 %v50
    %96 = vmatpush.msra.mxu0 %v49
    %97 = vmatpush.msra.mxu0 %v48
    %98 = vmatpush.msra.mxu0 %v47
    %99 = vmatpush.msra.mxu0 %v46
    %100 = vmatmul.f32.gmra.mxu0 %v80
    %v101 = vpop.f32.mrf.mxu0
    %v102 = vadd.f32 %v78, %v101
    %103 = vdwg.mxu0
    %104 = vmatpush.msra.mxu0 %v77
    %105 = vmatpush.msra.mxu0 %v76
    %106 = vmatpush.msra.mxu0 %v75
    %107 = vmatpush.msra.mxu0 %v74
    %108 = vmatpush.msra.mxu0 %v73
    %109 = vmatpush.msra.mxu0 %v72
    %110 = vmatpush.msra.mxu0 %v71
    %111 = vmatpush.msra.mxu0 %v70
    %112 = vmatpush.msra.mxu0 %v69
    %113 = vmatpush.msra.mxu0 %v68
    %114 = vmatpush.msra.mxu0 %v67
    %115 = vmatpush.msra.mxu0 %v66
    %116 = vmatpush.msra.mxu0 %v65
    %117 = vmatpush.msra.mxu0 %v64
    %118 = vmatpush.msra.mxu0 %v63
    %119 = vmatpush.msra.mxu0 %v62
    %120 = vmatmul.f32.gmra.mxu0 %v81
    %v121 = vpop.f32.mrf.mxu0
    %v122 = vadd.f32 %v102, %v121
    %123 = vdwg.mxu0
    %v124 = vmax.f32 %v122, 0.0
    %vm125 = vcmask 73728
    %126 = vst.msk [vmem:[#allocation7] sm:$0x1] %vm125, %v124
    // Predicated region
    $region22: #{forward.1} parent=1 // pred_check
      _
    $region23: #{forward.1} parent=1 // pred_check_branch
      %128 = sbr.rel (0) target = $region25
    $region24: #{forward.1} parent=1 // pred_region
      %130 = vsyncadd [#allocation4], 0
      %s132 = sshll.u32 [#allocation7], 4
      %s133 = int_to_ptr.vmem [resolvable:$true] %s132
      %s134 = sshll.u32 %s3, 4
      %s135 = int_to_ptr.hbm [resolvable:$true] %s134
      %137 = dma.vmem_to_hbm [thread:$0]  %s133, 16, %s135, [#allocation4]
    $region25: #{forward.1} parent=1 // pred_fallthru
      _
    // Predicated region
    $region26: #{forward.1} parent=1 // pred_check
      _
    $region27: #{forward.1} parent=1 // pred_check_branch
      %139 = sbr.rel (0) target = $region29
    $region28: #{forward.1} parent=1 // pred_region
      %141 = dma.done [#allocation4], 16
    $region29: #{forward.1} parent=1 // pred_fallthru
      _
    %142 = vsyncpa [#allocation3], 1
    %143 = vsyncpa [#allocation6], 1
    %144 = vsyncpa [#allocation4], 1

</llo_original>
